<compile_context>
chip_gen: v6e
topology: v6e:2x2x1
jax: 0.10.0
libtpu: 0.0.40
codegen_flags: <defaults>
</compile_context>

<pallas_src>
import jax
import jax.numpy as jnp
from jax.experimental import pallas as pl
from jax.experimental.pallas import tpu as pltpu


def _concat_pool_kernel(x_ref, mx_ref, av_ref):
    # x_ref : (TB, L)  rows = flattened (batch, channel) pairs
    # mx_ref: (TB, S)  per-row adaptive max pool
    # av_ref: (TB, S)  per-row adaptive avg pool
    x = x_ref[...]
    _, l = x.shape
    s = mx_ref.shape[1]
    w = l // s                                   # static bin width (L % S == 0)
    xf = x.astype(jnp.float32)                   # fp32 accumulation for the mean

    if s == 1:
        mx = jnp.max(x, axis=-1, keepdims=True)
        av = jnp.sum(xf, axis=-1, keepdims=True) * (1.0 / l)
    else:
        # Unrolled static loop over bins: contiguous lane slices, no reshape
        # that splits the lane dimension.
        mx_bins, av_bins = [], []
        for j in range(s):
            seg = x[:, j * w:(j + 1) * w]
            segf = xf[:, j * w:(j + 1) * w]
            mx_bins.append(jnp.max(seg, axis=-1, keepdims=True))
            av_bins.append(jnp.sum(segf, axis=-1, keepdims=True) * (1.0 / w))
        mx = jnp.concatenate(mx_bins, axis=-1)
        av = jnp.concatenate(av_bins, axis=-1)

    mx_ref[...] = mx.astype(mx_ref.dtype)
    av_ref[...] = av.astype(av_ref.dtype)


def adaptive_concat_pool1d(x, output_size=1):
    """Pallas equivalent of AdaptiveConcatPool1d(sz=output_size).

    x: (N, C, L) float array. Returns (N, 2*C, output_size).
    """
    n, c, l = x.shape
    s = output_size or 1
    assert l % s == 0, "kernel handles the evenly-divisible adaptive-pool case"
    # TODO(synk): uneven adaptive bins (L % output_size != 0) use variable-size
    # overlapping windows in PyTorch; not implemented here.

    rows = n * c
    x2 = x.reshape(rows, l)                      # free, layout-preserving

    # Rows per block: ~4 MiB per input buffer (Pallas double-buffers it),
    # multiple of 8 for sublane alignment, or the full row count if smaller.
    itemsize = jnp.dtype(x.dtype).itemsize
    budget_bytes = 4 * 1024 * 1024
    tb = budget_bytes // max(1, l * itemsize)
    tb = max(8, (tb // 8) * 8)
    if tb >= rows:
        tb = rows                                # full-extent block is always legal
    grid = (pl.cdiv(rows, tb),)

    grid_spec = pl.GridSpec(
        grid=grid,
        in_specs=[pl.BlockSpec((tb, l), lambda i: (i, 0))],
        out_specs=(pl.BlockSpec((tb, s), lambda i: (i, 0)),
                   pl.BlockSpec((tb, s), lambda i: (i, 0))),
    )

    mx, av = pl.pallas_call(
        _concat_pool_kernel,
        out_shape=(jax.ShapeDtypeStruct((rows, s), x.dtype),
                   jax.ShapeDtypeStruct((rows, s), x.dtype)),
        grid_spec=grid_spec,
        compiler_params=pltpu.CompilerParams(
            dimension_semantics=("parallel",),
            vmem_limit_bytes=32 * 1024 * 1024),
    )(x2)

    # Channel-concat to match torch.cat([max_pool, avg_pool], dim=1).
    return jnp.concatenate([mx.reshape(n, c, s), av.reshape(n, c, s)], axis=1)


if __name__ == "__main__":
    key = jax.random.PRNGKey(0)
    N, C, L = 2, 4, 16
    x = jax.random.normal(key, (N, C, L), dtype=jnp.float32)

    # output_size = 1 (the common fast.ai usage)
    out = adaptive_concat_pool1d(x, output_size=1)
    out = jax.block_until_ready(out)
    ref = jnp.concatenate(
        [jnp.max(x, axis=-1, keepdims=True),
         jnp.mean(x, axis=-1, keepdims=True)], axis=1)
    assert out.shape == (N, 2 * C, 1)
    assert jnp.allclose(out, ref, atol=1e-5), "mismatch vs reference (S=1)"

    # output_size > 1 (evenly-divisible bins)
    S2 = 4
    out2 = jax.block_until_ready(adaptive_concat_pool1d(x, output_size=S2))
    xr = x.reshape(N, C, S2, L // S2)
    ref2 = jnp.concatenate(
        [jnp.max(xr, axis=-1), jnp.mean(xr, axis=-1)], axis=1)
    assert out2.shape == (N, 2 * C, S2)
    assert jnp.allclose(out2, ref2, atol=1e-5), "mismatch vs reference (S>1)"

    print("KERNEL_OK")
</pallas_src>

<mosaic_0001>
module attributes {stable_mosaic.version = 11 : i64} {
  func.func @_concat_pool_kernel(%arg0: i32, %arg1: memref<8x16xf32, #tpu.memory_space<vmem>>, %arg2: memref<8x1xf32, #tpu.memory_space<vmem>>, %arg3: memref<8x1xf32, #tpu.memory_space<vmem>>) attributes {dimension_semantics = [#tpu.dimension_semantics<parallel>], iteration_bounds = array<i64: 1>, scalar_prefetch = 0 : i64, scratch_operands = 0 : i64, tpu.core_type = #tpu.core_type<tc>, window_params = [{transform_indices = @transform_0, window_bounds = array<i64: 8, 16>}, {transform_indices = @transform_1, window_bounds = array<i64: 8, 1>}, {transform_indices = @transform_2, window_bounds = array<i64: 8, 1>}]} {
    %c0 = arith.constant 0 : index
    %c0_0 = arith.constant 0 : index
    %0 = vector.load %arg1[%c0, %c0_0] : memref<8x16xf32, #tpu.memory_space<vmem>>, vector<8x16xf32>
    %cst = arith.constant dense<0xFF800000> : vector<8xf32>
    %1 = vector.multi_reduction <maximumf>, %0, %cst [1] : vector<8x16xf32> to vector<8xf32>
    %2 = vector.shape_cast %1 : vector<8xf32> to vector<8x1xf32>
    %cst_1 = arith.constant dense<0.000000e+00> : vector<8xf32>
    %3 = vector.multi_reduction <add>, %0, %cst_1 [1] : vector<8x16xf32> to vector<8xf32>
    %4 = vector.shape_cast %3 : vector<8xf32> to vector<8x1xf32>
    %cst_2 = arith.constant 6.250000e-02 : f32
    %5 = vector.broadcast %cst_2 : f32 to vector<8x1xf32>
    %6 = arith.mulf %4, %5 : vector<8x1xf32>
    %c0_3 = arith.constant 0 : index
    %c0_4 = arith.constant 0 : index
    %7 = vector.load %arg2[%c0_3, %c0_4] : memref<8x1xf32, #tpu.memory_space<vmem>>, vector<8x1xf32>
    tpu.vector_store %arg2[%c0_3, %c0_4], %2 {strides = array<i32>} : memref<8x1xf32, #tpu.memory_space<vmem>>, vector<8x1xf32>,
    %c0_5 = arith.constant 0 : index
    %c0_6 = arith.constant 0 : index
    %8 = vector.load %arg3[%c0_5, %c0_6] : memref<8x1xf32, #tpu.memory_space<vmem>>, vector<8x1xf32>
    tpu.vector_store %arg3[%c0_5, %c0_6], %6 {strides = array<i32>} : memref<8x1xf32, #tpu.memory_space<vmem>>, vector<8x1xf32>,
    return
  }
  func.func @transform_0(%arg0: i32) -> (i32, i32) {
    %c0_i32 = arith.constant 0 : i32
    %c0_i32_0 = arith.constant 0 : i32
    return %arg0, %c0_i32 : i32, i32
  }
  func.func @transform_1(%arg0: i32) -> (i32, i32) {
    %c0_i32 = arith.constant 0 : i32
    %c0_i32_0 = arith.constant 0 : i32
    return %arg0, %c0_i32 : i32, i32
  }
  func.func @transform_2(%arg0: i32) -> (i32, i32) {
    %c0_i32 = arith.constant 0 : i32
    %c0_i32_0 = arith.constant 0 : i32
    return %arg0, %c0_i32 : i32, i32
  }
}

</mosaic_0001>

<llo_original>
// kernel: tpu_custom_call.1
$region0: #{tpu_custom_call.1}
  #allocation0 [shape = 'u32[]', space=smem, size = 0x4, offset = 0x4, fixed_abs, tag = 'smem constant byte address 0x4 - core index']
  #allocation1 [shape = 'u32[144,128]{1,0:T(1,128)}', space=vmem, size = 0x12000, scoped, tag = 'internal scratch']
  %s0 = inlined_call_operand.hbm [shape: f32[8,16], index: 0, kind: input, shape index: {}]
  %s1 = inlined_call_operand.vmem [shape: f32[8,1], index: 1, kind: output, shape index: {0}]
  %s2 = inlined_call_operand.vmem [shape: f32[8,1], index: 2, kind: output, shape index: {1}]
  %3 = xla_tuple %s1, %s2
  %s4 = sld [smem:[#allocation0]]
  $region26: #{tpu_custom_call.1} parent=0
    _
  %s6 = ssub.s32 1, %s4
  %s7 = scalar_select 0, %s6, %s4
  $region1: #{tpu_custom_call.1} parent=0
    #allocation2 [shape = 'u8[4096]{0}', space=vmem, size = 0x1000, scoped, tag = 'input window, operand 0, single buffered']
    #allocation3 [shape = 's32[1]{0}', space=sflag, size = 0x4, scoped, tag = 'scoped memory for tpu_custom_call.1']
    %8 = vsyncpa [#allocation3], 0
    // Predicated region
    $region2: #{tpu_custom_call.1} parent=1 // pred_check
      _
    $region3: #{tpu_custom_call.1} parent=1 // pred_check_branch
      %10 = sbr.rel (0) target = $region5
    $region4: #{tpu_custom_call.1} parent=1 // pred_region
      %s12 = ssub.s32 128, 128
      %13 = vsyncadd [#allocation3], %s12
      %s15 = sshll.u32 [#allocation2], 4
      %s16 = int_to_ptr.vmem [resolvable:$true] %s15
      %18 = dma.hbm_to_vmem [thread:$0]  %s0, 128, %s16, [#allocation3]
    $region5: #{tpu_custom_call.1} parent=1 // pred_fallthru
      _
    // Predicated region
    $region6: #{tpu_custom_call.1} parent=1 // pred_check
      _
    $region7: #{tpu_custom_call.1} parent=1 // pred_check_branch
      %20 = sbr.rel (0) target = $region9
    $region8: #{tpu_custom_call.1} parent=1 // pred_region
      %21 = dma.done [#allocation3], 128
    $region9: #{tpu_custom_call.1} parent=1 // pred_fallthru
      _
    %v22 = vld [vmem:[#allocation2] sm:$0xff]
    %vm23 = vcmask 130048
    %v24 = vsel %vm23, %v22, -inf
    %25 = vmax.xlane.f32.xlu0 %v24
    %v26 = vpop.xlane.xlu0 %25
    %v27 = vsel %vm23, %v22, 0.0
    %28 = vadd.xlane.f32.xlu0 %v27
    %v29 = vpop.xlane.xlu0 %28
    %v30 = vmul.f32 %v29, 0.0625
    %vm31 = vcmask 7168
    %32 = vst.msk [vmem:[%s1] sm:$0xff] %vm31, %v26
    %33 = vst.msk [vmem:[%s2] sm:$0xff] %vm31, %v30
    // Predicated region
    $region10: #{tpu_custom_call.1} parent=1 // pred_check
      _
    $region11: #{tpu_custom_call.1} parent=1 // pred_check_branch
      %35 = sbr.rel (0) target = $region13
    $region12: #{tpu_custom_call.1} parent=1 // pred_region
      _
    $region13: #{tpu_custom_call.1} parent=1 // pred_fallthru
      _
    // Predicated region
    $region14: #{tpu_custom_call.1} parent=1 // pred_check
      _
    $region15: #{tpu_custom_call.1} parent=1 // pred_check_branch
      %37 = sbr.rel (0) target = $region17
    $region16: #{tpu_custom_call.1} parent=1 // pred_region
      _
    $region17: #{tpu_custom_call.1} parent=1 // pred_fallthru
      _
    // Predicated region
    $region18: #{tpu_custom_call.1} parent=1 // pred_check
      _
    $region19: #{tpu_custom_call.1} parent=1 // pred_check_branch
      %39 = sbr.rel (0) target = $region21
    $region20: #{tpu_custom_call.1} parent=1 // pred_region
      _
    $region21: #{tpu_custom_call.1} parent=1 // pred_fallthru
      _
    // Predicated region
    $region22: #{tpu_custom_call.1} parent=1 // pred_check
      _
    $region23: #{tpu_custom_call.1} parent=1 // pred_check_branch
      %41 = sbr.rel (0) target = $region25
    $region24: #{tpu_custom_call.1} parent=1 // pred_region
      _
    $region25: #{tpu_custom_call.1} parent=1 // pred_fallthru
      _
    %42 = vsyncpa [#allocation3], 1

</llo_original>
